<compile_context>
chip_gen: v7x
topology: tpu7x:2x2x1
jax: 0.10.0
libtpu: 0.0.40
codegen_flags: <defaults>
</compile_context>

<pallas_src>
import functools

import jax
import jax.numpy as jnp
from jax.experimental import pallas as pl
from jax.experimental.pallas import tpu as pltpu

_LANE = 128
_TARGET_TILE_BYTES = 4 * 1024 * 1024  # ~4 MiB f32 logits tile per buffer


def _prior_mlsm_kernel(logits_ref, labels_ref, prior_ref, out_ref,
                       *, steps, block_rows, total_rows, needs_mask):
    c = pl.program_id(0)
    s = pl.program_id(1)

    @pl.when(s == 0)
    def _init():
        out_ref[...] = jnp.zeros_like(out_ref)

    # Adjusted logits: (tb, L) + (1, L) broadcast of tau*log(prior+eps); cast after load.
    x = logits_ref[...].astype(jnp.float32) + prior_ref[...]
    y = labels_ref[...].astype(jnp.float32)

    # -[y*log(sigmoid(x)) + (1-y)*log(1-sigmoid(x))] == softplus(x) - y*x
    per_elem = jnp.maximum(x, 0.0) + jnp.log1p(jnp.exp(-jnp.abs(x))) - y * x

    if needs_mask:
        tb, L = per_elem.shape
        tile_start = (c * steps + s) * block_rows
        row_ids = tile_start + jax.lax.broadcasted_iota(jnp.int32, (tb, L), 0)
        # select (not multiply): NaN/Inf garbage in stale / duplicated tiles is dropped.
        per_elem = jnp.where(row_ids < total_rows, per_elem, 0.0)

    # Sublane-reduce the tile to one lane-dense row and accumulate into the resident
    # output block (no full-tile accumulator -> no extra vld/vst traffic per step).
    out_ref[...] += jnp.sum(per_elem, axis=0, keepdims=True)


def prior_multilabel_softmargin_loss(logits, labels, prior, *, tau=1.0, eps=1e-6,
                                     block_rows=None):
    """logits: (B, C) float, labels: (B, C) {0,1} (f32/bf16/int), prior: (C,) positive."""
    B, C = logits.shape
    n_true = B * C

    if labels.dtype == jnp.bool_:
        labels = labels.astype(jnp.int8)  # avoid packed-bool vreg layouts

    # tau folded into the prior once (tiny (C,) op); streamed as a single (1, L) row.
    scaled_log_prior = (tau * jnp.log(prior.astype(jnp.float32) + eps)).reshape(-1)

    # ---- choose a lane-dense 2-D layout (rows, L); no HBM repack of logits/labels ----
    if C % _LANE == 0:
        L, rows = C, B
        x2, y2 = logits, labels
        prior_row = scaled_log_prior.reshape(1, L)
    elif _LANE % C == 0 and (n_true % _LANE) == 0:
        # Flatten (B, C) -> (rows, 128): free contiguous reshape; the prior tiles with
        # period C inside each 128-lane row.
        L = _LANE
        rows = n_true // L
        x2 = logits.reshape(rows, L)
        y2 = labels.reshape(rows, L)
        prior_row = jnp.tile(scaled_log_prior, L // C).reshape(1, L)
    else:
        # TODO(synk): general C (neither multiple nor divisor of 128, or B*C % 128 != 0)
        # stays 2-D with partially used lanes; still correct and avoids an extra HBM
        # repack pass that column padding would cost.
        L, rows = C, B
        x2, y2 = logits, labels
        prior_row = scaled_log_prior.reshape(1, L)

    # ---- row-tile size: multiple of 32 (covers f32/bf16/int8 sublane tiling) ----
    if block_rows is None:
        tb = (_TARGET_TILE_BYTES // (4 * L)) // 32 * 32
    else:
        tb = (block_rows // 32) * 32
    tb = max(tb, 32)
    if rows < 32:
        tb = rows                          # block dims == full array dims: always legal
    else:
        tb = min(tb, (rows // 32) * 32)    # tb <= rows, still a multiple of 32

    n_tiles = -(-rows // tb)
    # Two parallel chunks whenever possible: required to use both v7x TensorCores,
    # near-zero overhead on single-core v5e/v6e.
    n_chunks = 2 if n_tiles >= 2 else 1
    steps = -(-n_tiles // n_chunks)

    # Mask is needed for a ragged last tile and/or for duplicated (clamped) steps.
    needs_mask = (rows % tb != 0) or (n_chunks * steps != n_tiles)

    kernel = functools.partial(
        _prior_mlsm_kernel,
        steps=steps, block_rows=tb, total_rows=rows, needs_mask=needs_mask)

    last_tile = n_tiles - 1

    def in_row_map(c, s):
        # Clamp so a chunk's extra steps (uneven split) re-read the last valid tile;
        # their contribution is masked to zero inside the kernel.
        return (jnp.minimum(c * steps + s, last_tile), 0)

    # Double-buffered footprint of both input streams + headroom; set explicitly so
    # 4 MiB tiles also work under v5e's 16 MiB default scoped VMEM, and stay well
    # inside v7x's 64 MiB physical VMEM.
    tile_in_bytes = tb * L * (x2.dtype.itemsize + y2.dtype.itemsize)
    vmem_limit = int(min(max(2 * tile_in_bytes + (8 << 20), 16 << 20), 56 << 20))

    partials = pl.pallas_call(
        kernel,
        out_shape=jax.ShapeDtypeStruct((n_chunks, L), jnp.float32),
        grid_spec=pltpu.PrefetchScalarGridSpec(
            num_scalar_prefetch=0,
            grid=(n_chunks, steps),
            in_specs=[
                pl.BlockSpec((tb, L), in_row_map),
                pl.BlockSpec((tb, L), in_row_map),
                pl.BlockSpec((1, L), lambda c, s: (0, 0)),
            ],
            out_specs=pl.BlockSpec((1, L), lambda c, s: (c, 0)),
        ),
        compiler_params=pltpu.CompilerParams(
            dimension_semantics=("parallel", "arbitrary"),
            vmem_limit_bytes=vmem_limit),
    )(x2, y2, prior_row)

    return jnp.sum(partials) / jnp.float32(n_true)


def _reference(logits, labels, prior, tau, eps):
    x = logits.astype(jnp.float32) + tau * jnp.log(prior.astype(jnp.float32) + eps)[None, :]
    y = labels.astype(jnp.float32)
    per_elem = y * jax.nn.log_sigmoid(x) + (1.0 - y) * jax.nn.log_sigmoid(-x)
    return jnp.mean(-jnp.mean(per_elem, axis=-1))


def _check(key, B, C, tau=1.0, eps=1e-6, block_rows=None, label_dtype=jnp.bfloat16):
    k_logits, k_labels, k_prior = jax.random.split(key, 3)
    logits = jax.random.normal(k_logits, (B, C), dtype=jnp.float32) * 2.0
    labels = (jax.random.uniform(k_labels, (B, C)) > 0.5).astype(label_dtype)
    raw = jax.random.uniform(k_prior, (C,), minval=0.1, maxval=1.0)
    prior = raw / jnp.sum(raw)

    loss = prior_multilabel_softmargin_loss(
        logits, labels, prior, tau=tau, eps=eps, block_rows=block_rows)
    loss = jax.block_until_ready(loss)
    ref = _reference(logits, labels, prior, tau, eps)
    assert jnp.allclose(loss, ref, atol=1e-5, rtol=5e-5), (B, C, float(loss), float(ref))


if __name__ == "__main__":
    key = jax.random.PRNGKey(0)
    k0, k1, k2, k3, k4 = jax.random.split(key, 5)

    # Primary demo (typical small multi-label head): B=8, C=16 -> flattened lane-dense
    # path (128 % 16 == 0, B*C == 128), single tile, bf16 labels.
    _check(k0, B=8, C=16)

    # Flattened path with 2 parallel chunks, ragged last tile AND an uneven chunk split
    # (clamped duplicated step masked in-kernel): rows=150, tb=32 -> 5 tiles, steps=3.
    _check(k1, B=1200, C=16, block_rows=32)

    # 2-D path (C multiple of 128), ragged last tile, f32 labels: rows=170, 6 tiles.
    _check(k2, B=170, C=128, block_rows=32, label_dtype=jnp.float32)

    # General-C fallback (C neither multiple nor divisor of 128): 2-D, single tile.
    _check(k3, B=10, C=48, tau=0.5)

    # Default (large) auto tile covering all rows in one step, no masking.
    _check(k4, B=256, C=128)

    print("KERNEL_OK")
</pallas_src>

<mosaic_0001>
module attributes {stable_mosaic.version = 11 : i64} {
  func.func @_prior_mlsm_kernel(%arg0: i32, %arg1: i32, %arg2: memref<1x128xf32, #tpu.memory_space<vmem>>, %arg3: memref<1x128xbf16, #tpu.memory_space<vmem>>, %arg4: memref<1x128xf32, #tpu.memory_space<vmem>>, %arg5: memref<1x128xf32, #tpu.memory_space<vmem>>) attributes {dimension_semantics = [#tpu.dimension_semantics<parallel>, #tpu.dimension_semantics<arbitrary>], iteration_bounds = array<i64: 1, 1>, scalar_prefetch = 0 : i64, scratch_operands = 0 : i64, tpu.core_type = #tpu.core_type<tc>, window_params = [{transform_indices = @transform_0, window_bounds = array<i64: 1, 128>}, {transform_indices = @transform_1, window_bounds = array<i64: 1, 128>}, {pipeline_mode = #tpu.pipeline_mode<synchronous>, transform_indices = @transform_2, window_bounds = array<i64: 1, 128>}, {transform_indices = @transform_3, window_bounds = array<i64: 1, 128>}]} {
    %c0_i32 = arith.constant 0 : i32
    %0 = arith.cmpi eq, %arg1, %c0_i32 : i32
    %1 = arith.extui %0 : i1 to i32
    %c0_i32_0 = arith.constant 0 : i32
    %2 = arith.cmpi ne, %1, %c0_i32_0 : i32
    scf.if %2 {
      %cst_12 = arith.constant 0.000000e+00 : f32
      %23 = vector.broadcast %cst_12 : f32 to vector<1x128xf32>
      %c0_13 = arith.constant 0 : index
      %c0_14 = arith.constant 0 : index
      %24 = vector.load %arg5[%c0_13, %c0_14] : memref<1x128xf32, #tpu.memory_space<vmem>>, vector<1x128xf32>
      tpu.vector_store %arg5[%c0_13, %c0_14], %23 {strides = array<i32>} : memref<1x128xf32, #tpu.memory_space<vmem>>, vector<1x128xf32>,
    } else {
    }
    %c0 = arith.constant 0 : index
    %c0_1 = arith.constant 0 : index
    %3 = vector.load %arg2[%c0, %c0_1] : memref<1x128xf32, #tpu.memory_space<vmem>>, vector<1x128xf32>
    %c0_2 = arith.constant 0 : index
    %c0_3 = arith.constant 0 : index
    %4 = vector.load %arg4[%c0_2, %c0_3] : memref<1x128xf32, #tpu.memory_space<vmem>>, vector<1x128xf32>
    %5 = arith.addf %3, %4 : vector<1x128xf32>
    %c0_4 = arith.constant 0 : index
    %c0_5 = arith.constant 0 : index
    %6 = vector.load %arg3[%c0_4, %c0_5] : memref<1x128xbf16, #tpu.memory_space<vmem>>, vector<1x128xbf16>
    %7 = arith.extf %6 : vector<1x128xbf16> to vector<1x128xf32>
    %cst = arith.constant 0.000000e+00 : f32
    %8 = vector.broadcast %cst : f32 to vector<1x128xf32>
    %9 = arith.maximumf %5, %8 : vector<1x128xf32>
    %10 = math.absf %5 : vector<1x128xf32>
    %cst_6 = arith.constant 0.000000e+00 : f32
    %11 = vector.broadcast %cst_6 : f32 to vector<1x128xf32>
    %12 = arith.subf %11, %10 : vector<1x128xf32>
    %13 = math.exp %12 : vector<1x128xf32>
    %14 = math.log1p %13 : vector<1x128xf32>
    %15 = arith.addf %9, %14 : vector<1x128xf32>
    %16 = arith.mulf %7, %5 : vector<1x128xf32>
    %17 = arith.subf %15, %16 : vector<1x128xf32>
    %c0_7 = arith.constant 0 : index
    %c0_8 = arith.constant 0 : index
    %18 = vector.load %arg5[%c0_7, %c0_8] : memref<1x128xf32, #tpu.memory_space<vmem>>, vector<1x128xf32>
    %cst_9 = arith.constant dense<0.000000e+00> : vector<128xf32>
    %19 = vector.multi_reduction <add>, %17, %cst_9 [0] : vector<1x128xf32> to vector<128xf32>
    %20 = vector.shape_cast %19 : vector<128xf32> to vector<1x128xf32>
    %21 = arith.addf %18, %20 : vector<1x128xf32>
    %c0_10 = arith.constant 0 : index
    %c0_11 = arith.constant 0 : index
    %22 = vector.load %arg5[%c0_10, %c0_11] : memref<1x128xf32, #tpu.memory_space<vmem>>, vector<1x128xf32>
    tpu.vector_store %arg5[%c0_10, %c0_11], %21 {strides = array<i32>} : memref<1x128xf32, #tpu.memory_space<vmem>>, vector<1x128xf32>,
    return
  }
  func.func @transform_0(%arg0: i32, %arg1: i32) -> (i32, i32) {
    %c1_i32 = arith.constant 1 : i32
    %0 = arith.muli %arg0, %c1_i32 : i32
    %1 = arith.addi %0, %arg1 : i32
    %c0_i32 = arith.constant 0 : i32
    %2 = arith.minsi %1, %c0_i32 : i32
    %c0_i32_0 = arith.constant 0 : i32
    %c0_i32_1 = arith.constant 0 : i32
    return %2, %c0_i32_0 : i32, i32
  }
  func.func @transform_1(%arg0: i32, %arg1: i32) -> (i32, i32) {
    %c1_i32 = arith.constant 1 : i32
    %0 = arith.muli %arg0, %c1_i32 : i32
    %1 = arith.addi %0, %arg1 : i32
    %c0_i32 = arith.constant 0 : i32
    %2 = arith.minsi %1, %c0_i32 : i32
    %c0_i32_0 = arith.constant 0 : i32
    %c0_i32_1 = arith.constant 0 : i32
    return %2, %c0_i32_0 : i32, i32
  }
  func.func @transform_2(%arg0: i32, %arg1: i32) -> (i32, i32) {
    %c0_i32 = arith.constant 0 : i32
    %c0_i32_0 = arith.constant 0 : i32
    %c0_i32_1 = arith.constant 0 : i32
    return %c0_i32, %c0_i32_0 : i32, i32
  }
  func.func @transform_3(%arg0: i32, %arg1: i32) -> (i32, i32) {
    %c0_i32 = arith.constant 0 : i32
    %c0_i32_0 = arith.constant 0 : i32
    return %arg0, %c0_i32 : i32, i32
  }
}

</mosaic_0001>

<llo_original>
// kernel: tpu_custom_call.1
$region0: #{tpu_custom_call.1}
  #allocation0 [shape = 'u32[]', space=smem, size = 0x4, offset = 0x4, fixed_abs, tag = 'smem constant byte address 0x4 - core index']
  #allocation1 [shape = 'u32[144,128]{1,0:T(1,128)}', space=vmem, size = 0x12000, scoped, tag = 'internal scratch']
  %s0 = inlined_call_operand.hbm [shape: f32[1,128], index: 0, kind: input, shape index: {}]
  %s1 = inlined_call_operand.vmem [shape: bf16[1,128], index: 1, kind: input, shape index: {}]
  %s2 = inlined_call_operand.vmem [shape: f32[1,128], index: 2, kind: input, shape index: {}]
  %s3 = inlined_call_operand.hbm [shape: f32[1,128], index: 3, kind: output, shape index: {}]
  %s4 = sld [smem:[#allocation0]]
  $region30: #{tpu_custom_call.1} parent=0
    _
  %s6 = ssub.s32 1, %s4
  %s7 = scalar_select 0, %s6, %s4
  $region1: #{tpu_custom_call.1} parent=0
    #allocation2 [shape = 'u8[512]{0}', space=vmem, size = 0x400, scoped, tag = 'input window, operand 0, single buffered']
    #allocation3 [shape = 's32[1]{0}', space=sflag, size = 0x4, scoped, tag = 'scoped memory for tpu_custom_call.1']
    #allocation4 [shape = 's32[1]{0}', space=sflag, size = 0x4, scoped, tag = 'scoped memory for tpu_custom_call.1']
    #allocation5 [shape = 'u8[512]{0}', space=vmem, size = 0x400, scoped, tag = 'output window, operand 0, single buffered']
    %8 = vsyncpa [#allocation3], 0
    %9 = vsyncpa [#allocation4], 0
    // Predicated region
    $region2: #{tpu_custom_call.1} parent=1 // pred_check
      _
    $region3: #{tpu_custom_call.1} parent=1 // pred_check_branch
      %11 = sbr.rel (0) target = $region5
    $region4: #{tpu_custom_call.1} parent=1 // pred_region
      %s12 = sadd.s32 0, 0
      %p13 = scmp.lt.s32.totalorder %s12, 0
      %s14 = scalar_select %p13, %s12, 0
      %s16 = ssub.s32 16, 16
      %17 = vsyncadd [#allocation3], %s16
      %s18 = smul.addr %s14, 16
      %s19 = scalar_lea.hbm %s0, %s18
      %s21 = sshll.u32 [#allocation2], 4
      %s22 = int_to_ptr.vmem [resolvable:$true] %s21
      %24 = dma.hbm_to_vmem [thread:$0]  %s19, 16, %s22, [#allocation3]
    $region5: #{tpu_custom_call.1} parent=1 // pred_fallthru
      _
    // Predicated region
    $region6: #{tpu_custom_call.1} parent=1 // pred_check
      _
    $region7: #{tpu_custom_call.1} parent=1 // pred_check_branch
      %26 = sbr.rel (0) target = $region9
    $region8: #{tpu_custom_call.1} parent=1 // pred_region
      %s27 = sadd.s32 0, 0
      %p28 = scmp.lt.s32.totalorder %s27, 0
      %s29 = scalar_select %p28, %s27, 0
      %p30 = scmp.lt.s32.totalorder %s29, 0
      %s31 = scalar_select %p30, %s29, 0
      %s32 = scalar_lea.vmem %s1, %s31
      %s33 = sadd.s32 0, 0
      %p34 = scmp.lt.s32.totalorder %s33, 0
      %s35 = scalar_select %p34, %s33, 0
    $region9: #{tpu_custom_call.1} parent=1 // pred_fallthru
      _
    // Predicated region
    $region10: #{tpu_custom_call.1} parent=1 // pred_check
      _
    $region11: #{tpu_custom_call.1} parent=1 // pred_check_branch
      %37 = sbr.rel (0) target = $region13
    $region12: #{tpu_custom_call.1} parent=1 // pred_region
      _
    $region13: #{tpu_custom_call.1} parent=1 // pred_fallthru
      _
    // Predicated region
    $region14: #{tpu_custom_call.1} parent=1 // pred_check
      _
    $region15: #{tpu_custom_call.1} parent=1 // pred_check_branch
      %39 = sbr.rel (0) target = $region17
    $region16: #{tpu_custom_call.1} parent=1 // pred_region
      %40 = dma.done [#allocation3], 16
    $region17: #{tpu_custom_call.1} parent=1 // pred_fallthru
      _
    %s41 = sadd.s32 0, 0
    %p42 = scmp.lt.s32.totalorder %s41, 0
    %s43 = scalar_select %p42, %s41, 0
    %p44 = scmp.lt.s32.totalorder %s43, 0
    %s45 = scalar_select %p44, %s43, 0
    %s46 = scalar_lea.vmem %s1, %s45
    %s47 = sadd.s32 0, 0
    %p48 = scmp.lt.s32.totalorder %s47, 0
    %s49 = scalar_select %p48, %s47, 0
    %s50 = sadd.s32 0, 0
    %p51 = scmp.lt.s32.totalorder %s50, 0
    %s52 = scalar_select %p51, %s50, 0
    %p53 = scmp.lt.s32.totalorder %s52, 0
    %s54 = scalar_select %p53, %s52, 0
    %s55 = scalar_lea.vmem %s1, %s54
    %s56 = sadd.s32 0, 0
    %p57 = scmp.lt.s32.totalorder %s56, 0
    %s58 = scalar_select %p57, %s56, 0
    %p59 = scmp.eq.s32.totalorder 0, 0
    // Predicated region
    $region18: #{tpu_custom_call.1} parent=1 // pred_check
      %p60 = pneg %p59
    $region19: #{tpu_custom_call.1} parent=1 // pred_check_branch
      %62 = sbr.rel (%p60) target = $region21
    $region20: #{tpu_custom_call.1} parent=1 // pred_region
      %63 = vst [vmem:[#allocation5] sm:$0x1] 0.0
    $region21: #{tpu_custom_call.1} parent=1 // pred_fallthru
      _
    %v64 = vld [vmem:[#allocation2] sm:$0x1]
    %v65 = vld [vmem:[%s2] sm:$0x1]
    %v66 = vadd.f32 %v64, %v65
    %v67 = vld [vmem:[%s55] sm:$0x1]
    %v68 = vunpack.c.l.bf16 %v67
    %v69 = vmax.f32 %v66, 0.0
    %v70 = vand.u32 2147483647, %v66
    %v71 = vsub.f32 0.0, %v70
    %v72 = vmul.f32 %v71, 1.442695
    %v73 = vpow.pop %v72
    %v74 = vadd.f32 %v73, 1.0
    %v75 = vlog2.pop %v74
    %v76 = vmul.f32 %v75, 0.6931472
    %v77 = vmul.f32 -0.5, %v73
    %v78 = vadd.f32 %v77, 1.0
    %v79 = vmul.f32 %v78, %v73
    %v80 = vand.u32 2147483647, %v73
    %vm81 = vcmp.lt.f32.partialorder %v80, 0.0004427343
    %v82 = vsel %vm81, %v79, %v76
    %v83 = vadd.f32 %v69, %v82
    %v84 = vmul.f32 %v68, %v66
    %v85 = vsub.f32 %v83, %v84
    %v86 = vld [vmem:[#allocation5] sm:$0x1]
    %v87 = vadd.f32 %v85, 0.0
    %v88 = vadd.f32 %v86, %v87
    %89 = vst [vmem:[#allocation5] sm:$0x1] %v88
    // Predicated region
    $region22: #{tpu_custom_call.1} parent=1 // pred_check
      _
    $region23: #{tpu_custom_call.1} parent=1 // pred_check_branch
      %91 = sbr.rel (0) target = $region25
    $region24: #{tpu_custom_call.1} parent=1 // pred_region
      %s93 = ssub.s32 16, 16
      %94 = vsyncadd [#allocation4], %s93
      %s96 = sshll.u32 [#allocation5], 4
      %s97 = int_to_ptr.vmem [resolvable:$true] %s96
      %99 = dma.vmem_to_hbm [thread:$0]  %s97, 16, %s3, [#allocation4]
    $region25: #{tpu_custom_call.1} parent=1 // pred_fallthru
      _
    // Predicated region
    $region26: #{tpu_custom_call.1} parent=1 // pred_check
      _
    $region27: #{tpu_custom_call.1} parent=1 // pred_check_branch
      %101 = sbr.rel (0) target = $region29
    $region28: #{tpu_custom_call.1} parent=1 // pred_region
      %102 = dma.done [#allocation4], 16
    $region29: #{tpu_custom_call.1} parent=1 // pred_fallthru
      _
    %103 = vsyncpa [#allocation3], 1
    %104 = vsyncpa [#allocation4], 1

</llo_original>
